<compile_context>
chip_gen: v7x
topology: tpu7x:2x2x1
jax: 0.10.0
libtpu: 0.0.40
codegen_flags: <defaults>
</compile_context>

<pallas_src>
import functools

import jax
import jax.numpy as jnp
from jax import lax
from jax.experimental import pallas as pl
from jax.experimental.pallas import tpu as pltpu

_LANE = 128
_SUB = 8


def _ila_proj_kernel(old_ref, new_ref, orig_ref, out_ref, acc_ref, *,
                     tile_rows, rows, blocks_per_chunk, needs_mask):
    p = pl.program_id(0)   # parallel chunk axis
    j = pl.program_id(1)   # reduction axis within chunk

    @pl.when(j == 0)
    def _():
        acc_ref[...] = jnp.zeros_like(acc_ref)

    old = old_ref[...].astype(jnp.float32)
    new = new_ref[...].astype(jnp.float32)
    orig = orig_ref[...].astype(jnp.float32)

    # (new - orig) * (old - orig), accumulated globally.
    prod = (new - orig) * (old - orig)

    if needs_mask:
        # Mask the *product* (not one operand) so garbage rows of a ragged /
        # clamped boundary block contribute exactly zero.
        row_start = (p * blocks_per_chunk + j) * tile_rows
        row_idx = lax.broadcasted_iota(jnp.int32, (tile_rows, _LANE), 0) + row_start
        prod = jnp.where(row_idx < rows, prod, 0.0)

    # Reduce only down to one vreg (8, 128): pure VPU adds, no per-step XLU /
    # SMEM scalar dependency chain.
    acc_ref[...] += prod.reshape(tile_rows // _SUB, _SUB, _LANE).sum(axis=0)

    @pl.when(j == pl.num_programs(1) - 1)
    def _():
        out_ref[0, 0] = jnp.sum(acc_ref[...])   # single epilogue reduce


def ila_proj_loss(old_attack_mid, new_mid, original_mid, coeff=None, *,
                  tile_rows_target=2048, num_chunks=2):
    # `coeff` is accepted but unused, exactly as in the PyTorch forward.
    del coeff
    n = old_attack_mid.shape[0]
    total = old_attack_mid.size

    # Sublane/lane-dense layout: (rows, 128) with rows a multiple of 8.
    # Pad (if any) is < 1024 elements on the flat view, not a full-array copy
    # per row; identical zero-padding of all three operands contributes 0.
    pad = (-total) % (_LANE * _SUB)

    def to_rows(a):
        flat = a.reshape(-1)
        if pad:
            flat = jnp.pad(flat, (0, pad))
        return flat.reshape(-1, _LANE)

    old2 = to_rows(old_attack_mid)
    new2 = to_rows(new_mid)
    orig2 = to_rows(original_mid)
    rows = old2.shape[0]                       # multiple of 8

    tile_rows = min(tile_rows_target, rows)    # multiple of 8 either way
    blocks_total = pl.cdiv(rows, tile_rows)
    num_chunks = max(1, int(num_chunks))
    P = num_chunks if blocks_total >= num_chunks else 1
    bpc = pl.cdiv(blocks_total, P)             # blocks per parallel chunk
    needs_mask = (P * bpc * tile_rows) != rows

    def in_map(p_, j_):
        blk = p_ * bpc + j_
        # Clamp over-run block indices (masked to zero inside the kernel).
        return (jnp.minimum(blk, blocks_total - 1), 0)

    in_spec = pl.BlockSpec((tile_rows, _LANE), in_map)

    partials = pl.pallas_call(
        functools.partial(_ila_proj_kernel, tile_rows=tile_rows, rows=rows,
                          blocks_per_chunk=bpc, needs_mask=needs_mask),
        out_shape=jax.ShapeDtypeStruct((P, 1), jnp.float32),
        grid_spec=pltpu.PrefetchScalarGridSpec(
            num_scalar_prefetch=0,
            grid=(P, bpc),
            in_specs=[in_spec, in_spec, in_spec],
            out_specs=pl.BlockSpec((1, 1), lambda p_, j_: (p_, 0),
                                   memory_space=pltpu.SMEM),
            scratch_shapes=[pltpu.VMEM((_SUB, _LANE), jnp.float32)],
        ),
        compiler_params=pltpu.CompilerParams(
            dimension_semantics=("parallel", "arbitrary"),
            vmem_limit_bytes=32 * 1024 * 1024,
        ),
    )(old2, new2, orig2)

    return jnp.sum(partials) / n


def _reference(old_attack_mid, new_mid, original_mid):
    n = old_attack_mid.shape[0]
    x = (old_attack_mid - original_mid).reshape(n, -1).astype(jnp.float32)
    y = (new_mid - original_mid).reshape(n, -1).astype(jnp.float32)
    return jnp.sum(y * x) / n


if __name__ == "__main__":
    key = jax.random.PRNGKey(0)

    # Test 1: small NCHW mid-layer activations (batch=2, channels=4, 16x16).
    k1, k2, k3 = jax.random.split(key, 3)
    shape = (2, 4, 16, 16)
    old_attack_mid = jax.random.normal(k1, shape, dtype=jnp.float32)
    new_mid = jax.random.normal(k2, shape, dtype=jnp.float32)
    original_mid = jax.random.normal(k3, shape, dtype=jnp.float32)
    coeff = 1.0  # unused by the forward, matching the PyTorch module

    loss = ila_proj_loss(old_attack_mid, new_mid, original_mid, coeff)
    loss = jax.block_until_ready(loss)
    ref = _reference(old_attack_mid, new_mid, original_mid)
    assert jnp.allclose(loss, ref, rtol=1e-5, atol=1e-5), (loss, ref)

    # Test 2: exercise the parallel-chunk / clamped-block / masked path with a
    # tiny tile so multiple blocks exist even at small shapes.
    k4, k5, k6 = jax.random.split(jax.random.PRNGKey(1), 3)
    shape2 = (2, 5, 16, 32)
    a = jax.random.normal(k4, shape2, dtype=jnp.float32)
    b = jax.random.normal(k5, shape2, dtype=jnp.float32)
    c = jax.random.normal(k6, shape2, dtype=jnp.float32)
    loss2 = ila_proj_loss(a, b, c, coeff, tile_rows_target=8, num_chunks=2)
    loss2 = jax.block_until_ready(loss2)
    ref2 = _reference(a, b, c)
    assert jnp.allclose(loss2, ref2, rtol=1e-5, atol=1e-5), (loss2, ref2)

    print("KERNEL_OK")
</pallas_src>

<mosaic_0001>
module attributes {stable_mosaic.version = 11 : i64} {
  func.func @_ila_proj_kernel(%arg0: i32, %arg1: i32, %arg2: memref<16x128xf32, #tpu.memory_space<vmem>>, %arg3: memref<16x128xf32, #tpu.memory_space<vmem>>, %arg4: memref<16x128xf32, #tpu.memory_space<vmem>>, %arg5: memref<1x1xf32, #tpu.memory_space<smem>>, %arg6: memref<8x128xf32, #tpu.memory_space<vmem>>) attributes {dimension_semantics = [#tpu.dimension_semantics<parallel>, #tpu.dimension_semantics<arbitrary>], iteration_bounds = array<i64: 1, 1>, scalar_prefetch = 0 : i64, scratch_operands = 1 : i64, tpu.core_type = #tpu.core_type<tc>, window_params = [{transform_indices = @transform_0, window_bounds = array<i64: 16, 128>}, {transform_indices = @transform_1, window_bounds = array<i64: 16, 128>}, {transform_indices = @transform_2, window_bounds = array<i64: 16, 128>}, {transform_indices = @transform_3, window_bounds = array<i64: 1, 1>}]} {
    %c0_i32 = arith.constant 0 : i32
    %0 = arith.cmpi eq, %arg1, %c0_i32 : i32
    %1 = arith.extui %0 : i1 to i32
    %c0_i32_0 = arith.constant 0 : i32
    %2 = arith.cmpi ne, %1, %c0_i32_0 : i32
    scf.if %2 {
      %cst_12 = arith.constant 0.000000e+00 : f32
      %17 = vector.broadcast %cst_12 : f32 to vector<8x128xf32>
      %c0_13 = arith.constant 0 : index
      %c0_14 = arith.constant 0 : index
      %18 = vector.load %arg6[%c0_13, %c0_14] : memref<8x128xf32, #tpu.memory_space<vmem>>, vector<8x128xf32>
      tpu.vector_store %arg6[%c0_13, %c0_14], %17 {strides = array<i32>} : memref<8x128xf32, #tpu.memory_space<vmem>>, vector<8x128xf32>,
    } else {
    }
    %c0 = arith.constant 0 : index
    %c0_1 = arith.constant 0 : index
    %3 = vector.load %arg2[%c0, %c0_1] : memref<16x128xf32, #tpu.memory_space<vmem>>, vector<16x128xf32>
    %c0_2 = arith.constant 0 : index
    %c0_3 = arith.constant 0 : index
    %4 = vector.load %arg3[%c0_2, %c0_3] : memref<16x128xf32, #tpu.memory_space<vmem>>, vector<16x128xf32>
    %c0_4 = arith.constant 0 : index
    %c0_5 = arith.constant 0 : index
    %5 = vector.load %arg4[%c0_4, %c0_5] : memref<16x128xf32, #tpu.memory_space<vmem>>, vector<16x128xf32>
    %6 = arith.subf %4, %5 : vector<16x128xf32>
    %7 = arith.subf %3, %5 : vector<16x128xf32>
    %8 = arith.mulf %6, %7 : vector<16x128xf32>
    %c0_6 = arith.constant 0 : index
    %c0_7 = arith.constant 0 : index
    %9 = vector.load %arg6[%c0_6, %c0_7] : memref<8x128xf32, #tpu.memory_space<vmem>>, vector<8x128xf32>
    %10 = vector.shape_cast %8 : vector<16x128xf32> to vector<2x8x128xf32>
    %cst = arith.constant dense<0.000000e+00> : vector<8x128xf32>
    %11 = vector.multi_reduction <add>, %10, %cst [0] : vector<2x8x128xf32> to vector<8x128xf32>
    %12 = arith.addf %9, %11 : vector<8x128xf32>
    %c0_8 = arith.constant 0 : index
    %c0_9 = arith.constant 0 : index
    %13 = vector.load %arg6[%c0_8, %c0_9] : memref<8x128xf32, #tpu.memory_space<vmem>>, vector<8x128xf32>
    tpu.vector_store %arg6[%c0_8, %c0_9], %12 {strides = array<i32>} : memref<8x128xf32, #tpu.memory_space<vmem>>, vector<8x128xf32>,
    %c0_i32_10 = arith.constant 0 : i32
    %14 = arith.cmpi eq, %arg1, %c0_i32_10 : i32
    %15 = arith.extui %14 : i1 to i32
    %c0_i32_11 = arith.constant 0 : i32
    %16 = arith.cmpi ne, %15, %c0_i32_11 : i32
    scf.if %16 {
      %c0_12 = arith.constant 0 : index
      %c0_13 = arith.constant 0 : index
      %17 = vector.load %arg6[%c0_12, %c0_13] : memref<8x128xf32, #tpu.memory_space<vmem>>, vector<8x128xf32>
      %18 = vector.shape_cast %17 : vector<8x128xf32> to vector<1x8x128xf32>
      %cst_14 = arith.constant dense<0.000000e+00> : vector<1xf32>
      %19 = vector.multi_reduction <add>, %18, %cst_14 [1, 2] : vector<1x8x128xf32> to vector<1xf32>
      %20 = vector.shape_cast %19 : vector<1xf32> to vector<1x1x1xf32>
      %21 = vector.extract %20[0, 0, 0] : f32 from vector<1x1x1xf32>
      %c0_15 = arith.constant 0 : index
      %c0_16 = arith.constant 0 : index
      %22 = memref.load %arg5[%c0_15, %c0_16] : memref<1x1xf32, #tpu.memory_space<smem>>
      memref.store %21, %arg5[%c0_15, %c0_16] : memref<1x1xf32, #tpu.memory_space<smem>>
    } else {
    }
    return
  }
  func.func @transform_0(%arg0: i32, %arg1: i32) -> (i32, i32) {
    %c1_i32 = arith.constant 1 : i32
    %0 = arith.muli %arg0, %c1_i32 : i32
    %1 = arith.addi %0, %arg1 : i32
    %c0_i32 = arith.constant 0 : i32
    %2 = arith.minsi %1, %c0_i32 : i32
    %c0_i32_0 = arith.constant 0 : i32
    %c0_i32_1 = arith.constant 0 : i32
    return %2, %c0_i32_0 : i32, i32
  }
  func.func @transform_1(%arg0: i32, %arg1: i32) -> (i32, i32) {
    %c1_i32 = arith.constant 1 : i32
    %0 = arith.muli %arg0, %c1_i32 : i32
    %1 = arith.addi %0, %arg1 : i32
    %c0_i32 = arith.constant 0 : i32
    %2 = arith.minsi %1, %c0_i32 : i32
    %c0_i32_0 = arith.constant 0 : i32
    %c0_i32_1 = arith.constant 0 : i32
    return %2, %c0_i32_0 : i32, i32
  }
  func.func @transform_2(%arg0: i32, %arg1: i32) -> (i32, i32) {
    %c1_i32 = arith.constant 1 : i32
    %0 = arith.muli %arg0, %c1_i32 : i32
    %1 = arith.addi %0, %arg1 : i32
    %c0_i32 = arith.constant 0 : i32
    %2 = arith.minsi %1, %c0_i32 : i32
    %c0_i32_0 = arith.constant 0 : i32
    %c0_i32_1 = arith.constant 0 : i32
    return %2, %c0_i32_0 : i32, i32
  }
  func.func @transform_3(%arg0: i32, %arg1: i32) -> (i32, i32) {
    %c0_i32 = arith.constant 0 : i32
    %c0_i32_0 = arith.constant 0 : i32
    return %arg0, %c0_i32 : i32, i32
  }
}

</mosaic_0001>

<llo_original>
// kernel: tpu_custom_call.1
$region0: #{tpu_custom_call.1}
  #allocation0 [shape = 'u32[]', space=smem, size = 0x4, offset = 0x4, fixed_abs, tag = 'smem constant byte address 0x4 - core index']
  #allocation1 [shape = 'u32[144,128]{1,0:T(1,128)}', space=vmem, size = 0x12000, scoped, tag = 'internal scratch']
  #allocation2 [shape = 'f32[8,128]{1,0:T(8,128)}', space=vmem, size = 0x1000, scoped, tag = 'scratch operand']
  %s0 = inlined_call_operand.hbm [shape: f32[16,128], index: 0, kind: input, shape index: {}]
  %s1 = inlined_call_operand.hbm [shape: f32[16,128], index: 1, kind: input, shape index: {}]
  %s2 = inlined_call_operand.hbm [shape: f32[16,128], index: 2, kind: input, shape index: {}]
  %s3 = inlined_call_operand.hbm [shape: f32[1,1], index: 3, kind: output, shape index: {}]
  %s4 = sld [smem:[#allocation0]]
  $region42: #{tpu_custom_call.1} parent=0
    _
  %s6 = ssub.s32 1, %s4
  %s7 = scalar_select 0, %s6, %s4
  $region1: #{tpu_custom_call.1} parent=0
    #allocation3 [shape = 'u8[8192]{0}', space=vmem, size = 0x2000, scoped, tag = 'input window, operand 0, single buffered']
    #allocation4 [shape = 's32[1]{0}', space=sflag, size = 0x4, scoped, tag = 'scoped memory for tpu_custom_call.1']
    #allocation5 [shape = 's32[1]{0}', space=sflag, size = 0x4, scoped, tag = 'scoped memory for tpu_custom_call.1']
    #allocation6 [shape = 'u8[8192]{0}', space=vmem, size = 0x2000, scoped, tag = 'input window, operand 1, single buffered']
    #allocation7 [shape = 's32[1]{0}', space=sflag, size = 0x4, scoped, tag = 'scoped memory for tpu_custom_call.1']
    #allocation8 [shape = 'u8[8192]{0}', space=vmem, size = 0x2000, scoped, tag = 'input window, operand 2, single buffered']
    #allocation9 [shape = 'u8[512]{0}', space=smem, size = 0x200, scoped, tag = 'output window, operand 0, single buffered']
    %8 = vsyncpa [#allocation4], 0
    %9 = vsyncpa [#allocation7], 0
    %10 = vsyncpa [#allocation5], 0
    // Predicated region
    $region2: #{tpu_custom_call.1} parent=1 // pred_check
      _
    $region3: #{tpu_custom_call.1} parent=1 // pred_check_branch
      %12 = sbr.rel (0) target = $region5
    $region4: #{tpu_custom_call.1} parent=1 // pred_region
      %s13 = sadd.s32 0, 0
      %p14 = scmp.lt.s32.totalorder %s13, 0
      %s15 = scalar_select %p14, %s13, 0
      %s16 = smul.u32 2, %s15
      %s18 = ssub.s32 256, 256
      %19 = vsyncadd [#allocation4], %s18
      %s20 = smul.addr %s16, 128
      %s21 = scalar_lea.hbm %s0, %s20
      %s22 = sshll.u32 [#allocation3], 4
      %s23 = int_to_ptr.vmem [resolvable:$true] %s22
      %28 = dma.hbm_to_vmem [thread:$0]  %s21, 256, %s23, [#allocation4], 128, 128, 8
    $region5: #{tpu_custom_call.1} parent=1 // pred_fallthru
      _
    // Predicated region
    $region6: #{tpu_custom_call.1} parent=1 // pred_check
      _
    $region7: #{tpu_custom_call.1} parent=1 // pred_check_branch
      %30 = sbr.rel (0) target = $region9
    $region8: #{tpu_custom_call.1} parent=1 // pred_region
      %s31 = sadd.s32 0, 0
      %p32 = scmp.lt.s32.totalorder %s31, 0
      %s33 = scalar_select %p32, %s31, 0
      %s34 = smul.u32 2, %s33
      %s36 = ssub.s32 256, 256
      %37 = vsyncadd [#allocation7], %s36
      %s38 = smul.addr %s34, 128
      %s39 = scalar_lea.hbm %s1, %s38
      %s40 = sshll.u32 [#allocation6], 4
      %s41 = int_to_ptr.vmem [resolvable:$true] %s40
      %46 = dma.hbm_to_vmem [thread:$0]  %s39, 256, %s41, [#allocation7], 128, 128, 8
    $region9: #{tpu_custom_call.1} parent=1 // pred_fallthru
      _
    // Predicated region
    $region10: #{tpu_custom_call.1} parent=1 // pred_check
      _
    $region11: #{tpu_custom_call.1} parent=1 // pred_check_branch
      %48 = sbr.rel (0) target = $region13
    $region12: #{tpu_custom_call.1} parent=1 // pred_region
      %s49 = sadd.s32 0, 0
      %p50 = scmp.lt.s32.totalorder %s49, 0
      %s51 = scalar_select %p50, %s49, 0
      %s52 = smul.u32 2, %s51
      %s54 = ssub.s32 256, 256
      %55 = vsyncadd [#allocation7], %s54
      %s56 = smul.addr %s52, 128
      %s57 = scalar_lea.hbm %s2, %s56
      %s58 = sshll.u32 [#allocation8], 4
      %s59 = int_to_ptr.vmem [resolvable:$true] %s58
      %64 = dma.hbm_to_vmem [thread:$0]  %s57, 256, %s59, [#allocation7], 128, 128, 8
    $region13: #{tpu_custom_call.1} parent=1 // pred_fallthru
      _
    // Predicated region
    $region14: #{tpu_custom_call.1} parent=1 // pred_check
      _
    $region15: #{tpu_custom_call.1} parent=1 // pred_check_branch
      %66 = sbr.rel (0) target = $region17
    $region16: #{tpu_custom_call.1} parent=1 // pred_region
      %67 = dma.done [#allocation4], 256
    $region17: #{tpu_custom_call.1} parent=1 // pred_fallthru
      _
    // Predicated region
    $region18: #{tpu_custom_call.1} parent=1 // pred_check
      _
    $region19: #{tpu_custom_call.1} parent=1 // pred_check_branch
      %69 = sbr.rel (0) target = $region21
    $region20: #{tpu_custom_call.1} parent=1 // pred_region
      %70 = dma.done [#allocation7], 256
    $region21: #{tpu_custom_call.1} parent=1 // pred_fallthru
      _
    // Predicated region
    $region22: #{tpu_custom_call.1} parent=1 // pred_check
      _
    $region23: #{tpu_custom_call.1} parent=1 // pred_check_branch
      %72 = sbr.rel (0) target = $region25
    $region24: #{tpu_custom_call.1} parent=1 // pred_region
      %73 = dma.done [#allocation7], 256
    $region25: #{tpu_custom_call.1} parent=1 // pred_fallthru
      _
    %s74 = sadd.s32 0, 0
    %p75 = scmp.lt.s32.totalorder %s74, 0
    %s76 = scalar_select %p75, %s74, 0
    %s77 = smul.u32 2, %s76
    %s78 = sadd.s32 0, 0
    %p79 = scmp.lt.s32.totalorder %s78, 0
    %s80 = scalar_select %p79, %s78, 0
    %s81 = smul.u32 2, %s80
    %s82 = sadd.s32 0, 0
    %p83 = scmp.lt.s32.totalorder %s82, 0
    %s84 = scalar_select %p83, %s82, 0
    %s85 = smul.u32 2, %s84
    %p86 = scmp.eq.s32.totalorder 0, 0
    // Predicated region
    $region26: #{tpu_custom_call.1} parent=1 // pred_check
      %p87 = pneg %p86
    $region27: #{tpu_custom_call.1} parent=1 // pred_check_branch
      %89 = sbr.rel (%p87) target = $region29
    $region28: #{tpu_custom_call.1} parent=1 // pred_region
      %90 = vst [vmem:[#allocation2] sm:$0xff] 0.0
    $region29: #{tpu_custom_call.1} parent=1 // pred_fallthru
      _
    %v91 = vld [vmem:[#allocation3] sm:$0xff]
    %v92 = vld [vmem:[#allocation3 + $0x8] sm:$0xff]
    %v93 = vld [vmem:[#allocation6] sm:$0xff]
    %v94 = vld [vmem:[#allocation6 + $0x8] sm:$0xff]
    %v95 = vld [vmem:[#allocation8] sm:$0xff]
    %v96 = vld [vmem:[#allocation8 + $0x8] sm:$0xff]
    %v97 = vsub.f32 %v93, %v95
    %v98 = vsub.f32 %v94, %v96
    %v99 = vsub.f32 %v91, %v95
    %v100 = vsub.f32 %v92, %v96
    %v101 = vmul.f32 %v97, %v99
    %v102 = vmul.f32 %v98, %v100
    %v103 = vld [vmem:[#allocation2] sm:$0xff]
    %v104 = vadd.f32 %v101, %v102
    %v105 = vadd.f32 %v103, %v104
    %106 = vst [vmem:[#allocation2] sm:$0xff] %v105
    // Predicated region
    $region30: #{tpu_custom_call.1} parent=1 // pred_check
      %p107 = pneg %p86
    $region31: #{tpu_custom_call.1} parent=1 // pred_check_branch
      %109 = sbr.rel (%p107) target = $region33
    $region32: #{tpu_custom_call.1} parent=1 // pred_region
      %v110 = vld [vmem:[#allocation2] sm:$0xff]
      %111 = vadd.xlane.f32.xlu0 %v110
      %v112 = vpop.xlane.xlu0 %111
      %v113 = vrot.slane %v112, 4
      %v114 = vadd.f32 %v112, %v113
      %v115 = vrot.slane %v114, 2
      %v116 = vadd.f32 %v114, %v115
      %v117 = vrot.slane %v116, 1
      %v118 = vadd.f32 %v116, %v117
      %s119 = vtos %v118
      %s120 = scalar_lea.smem [#allocation9], 0
      %121 = sst [smem:[%s120]] %s119
    $region33: #{tpu_custom_call.1} parent=1 // pred_fallthru
      _
    // Predicated region
    $region34: #{tpu_custom_call.1} parent=1 // pred_check
      _
    $region35: #{tpu_custom_call.1} parent=1 // pred_check_branch
      %123 = sbr.rel (0) target = $region37
    $region36: #{tpu_custom_call.1} parent=1 // pred_region
      %s125 = ssub.s32 16, 16
      %126 = vsyncadd [#allocation5], %s125
      %129 = dma.smem_to_hbm [#allocation9], 16, %s3, [#allocation5]
    $region37: #{tpu_custom_call.1} parent=1 // pred_fallthru
      _
    // Predicated region
    $region38: #{tpu_custom_call.1} parent=1 // pred_check
      _
    $region39: #{tpu_custom_call.1} parent=1 // pred_check_branch
      %131 = sbr.rel (0) target = $region41
    $region40: #{tpu_custom_call.1} parent=1 // pred_region
      %132 = dma.done [#allocation5], 16
    $region41: #{tpu_custom_call.1} parent=1 // pred_fallthru
      _
    %133 = sfence
    %134 = vsyncpa [#allocation4], 1
    %135 = vsyncpa [#allocation7], 1
    %136 = vsyncpa [#allocation5], 1

</llo_original>
